<compile_context>
chip_gen: v5e
topology: v5e:2x2
jax: 0.10.0
libtpu: 0.0.40
codegen_flags: <defaults>
</compile_context>

<pallas_src>
import functools
from enum import Enum
from typing import List, Optional

import jax
import jax.numpy as jnp
from jax.experimental import pallas as pl
from jax.experimental.pallas import tpu as pltpu


class AdaptiveMode(Enum):
    NONE = "NONE"
    SOFT = "SOFT"
    SCALED = "SCALED"


_LANE = 128  # stacked scalar losses are zero-padded to a multiple of the lane width


def _adapt_kernel(losses_ref, out_ref, *, mode: str, beta: float, k: int, n_rec: int):
    """losses_ref: (1, P) f32 VMEM tile, zero-padded past lane k-1.
    out_ref: (1, 1) f32 VMEM tile."""
    losses = losses_ref[...]
    lane = jax.lax.broadcasted_iota(jnp.int32, losses.shape, 1)

    if mode == "SOFT":
        # Stateless softmax(beta * losses) weighting over the k valid lanes.
        z = jnp.where(lane < k, beta * losses, -jnp.inf)
        m = jnp.max(z, axis=-1, keepdims=True)
        e = jnp.exp(z - m)                                  # exp(-inf) == 0 on pads
        denom = jnp.sum(e, axis=-1, keepdims=True)
        out = jnp.sum(e * losses, axis=-1, keepdims=True) * pl.reciprocal(
            denom, approx=False)                            # keep tight tolerance
    elif mode == "SCALED":
        # Weight 1 on each reconstruction lane, n_rec on the latent lane (k-1).
        # Padded lanes hold 0.0, so no explicit validity mask is needed.
        w = jnp.where(lane == (k - 1), jnp.float32(n_rec), jnp.float32(1.0))
        out = jnp.sum(w * losses, axis=-1, keepdims=True)
    else:  # NONE
        out = jnp.sum(losses, axis=-1, keepdims=True)

    out_ref[...] = out


def adapt_forward(
    reconstructions: List[jax.Array],
    latent_loss: jax.Array,
    mode: Optional[AdaptiveMode],
    soft_adapt_beta: Optional[float] = None,
    use_pallas: bool = True,
) -> jax.Array:
    """JAX/Pallas equivalent of Adapt.forward (training flag has no effect here)."""
    if mode == AdaptiveMode.SOFT and soft_adapt_beta is None:
        raise ValueError("SoftAdapt requires a beta value")

    n_rec = len(reconstructions)
    scalars = [jnp.asarray(r, jnp.float32).reshape(()) for r in reconstructions]
    scalars.append(jnp.asarray(latent_loss, jnp.float32).reshape(()))
    k = len(scalars)

    mode_str = mode.value if mode is not None else "NONE"

    # Fast path: NONE / SCALED are a handful of scalar adds; a kernel launch
    # costs orders of magnitude more than the arithmetic.
    if not use_pallas and mode_str in ("NONE", "SCALED"):
        latent = scalars[-1]
        total = jnp.sum(jnp.stack(scalars[:-1])) if n_rec > 0 else jnp.float32(0.0)
        scale = jnp.float32(n_rec) if mode_str == "SCALED" else jnp.float32(1.0)
        return total + scale * latent

    # Single lane-dense (1, P) tile built with one pad op (no per-array scatters).
    pad = max(_LANE, ((k + _LANE - 1) // _LANE) * _LANE)
    stacked = jnp.stack(scalars)                                  # (k,)
    losses_pad = jnp.pad(stacked, (0, pad - k)).reshape(1, pad)   # (1, P)

    beta = float(soft_adapt_beta) if soft_adapt_beta is not None else 0.0
    kernel = functools.partial(
        _adapt_kernel, mode=mode_str, beta=beta, k=k, n_rec=n_rec
    )

    out = pl.pallas_call(
        kernel,
        out_shape=jax.ShapeDtypeStruct((1, 1), jnp.float32),
        in_specs=[pl.BlockSpec(memory_space=pltpu.MemorySpace.VMEM)],
        out_specs=pl.BlockSpec(memory_space=pltpu.MemorySpace.VMEM),
    )(losses_pad)

    return out[0, 0]


def _reference(reconstructions, latent_loss, mode, beta=None):
    recs = [jnp.asarray(r, jnp.float32).reshape(()) for r in reconstructions]
    lat = jnp.asarray(latent_loss, jnp.float32).reshape(())
    if mode is None or mode == AdaptiveMode.NONE:
        return sum(recs) + lat
    if mode == AdaptiveMode.SCALED:
        return sum(recs) + float(len(recs)) * lat
    if mode == AdaptiveMode.SOFT:
        ls = jnp.stack(recs + [lat])
        w = jax.nn.softmax(beta * ls)
        return jnp.sum(w * ls)
    raise ValueError("Invalid adaptive mode")


if __name__ == "__main__":
    key = jax.random.PRNGKey(0)
    k1, k2, k3, k4 = jax.random.split(key, 4)

    # Synthetic scalar losses (e.g. per-branch reconstruction MSEs + latent KL).
    reconstructions = [
        jnp.mean(jax.random.normal(k1, (2, 4, 16, 16)) ** 2),
        jnp.mean(jax.random.normal(k2, (2, 4, 16, 16)) ** 2),
        jnp.mean(jax.random.normal(k3, (2, 4, 16, 16)) ** 2),
    ]
    latent_loss = jnp.mean(jax.random.normal(k4, (2, 32)) ** 2)

    ok = True

    # Pallas kernel path, all modes.
    for mode, beta in [
        (AdaptiveMode.NONE, None),
        (AdaptiveMode.SCALED, None),
        (AdaptiveMode.SOFT, 0.1),
    ]:
        got = adapt_forward(reconstructions, latent_loss, mode, beta)
        got = jax.block_until_ready(got)
        want = _reference(reconstructions, latent_loss, mode, beta)
        if not jnp.allclose(got, want, rtol=1e-5, atol=1e-6):
            ok = False
            print(f"MISMATCH (pallas) mode={mode}: got={got} want={want}")

    # Fast path (no kernel launch) for NONE / SCALED.
    for mode in [AdaptiveMode.NONE, AdaptiveMode.SCALED]:
        got = adapt_forward(reconstructions, latent_loss, mode, use_pallas=False)
        got = jax.block_until_ready(got)
        want = _reference(reconstructions, latent_loss, mode)
        if not jnp.allclose(got, want, rtol=1e-5, atol=1e-6):
            ok = False
            print(f"MISMATCH (fast path) mode={mode}: got={got} want={want}")

    if ok:
        print("KERNEL_OK")
</pallas_src>

<mosaic_0001>
module attributes {stable_mosaic.version = 11 : i64} {
  func.func @_adapt_kernel(%arg0: memref<1x128xf32, #tpu.memory_space<vmem>>, %arg1: memref<1x1xf32, #tpu.memory_space<vmem>>) attributes {dimension_semantics = [], scalar_prefetch = 0 : i64, scratch_operands = 0 : i64, tpu.core_type = #tpu.core_type<tc>} {
    %c0 = arith.constant 0 : index
    %c0_0 = arith.constant 0 : index
    %0 = vector.load %arg0[%c0, %c0_0] : memref<1x128xf32, #tpu.memory_space<vmem>>, vector<1x128xf32>
    %cst = arith.constant dense<0.000000e+00> : vector<1xf32>
    %1 = vector.multi_reduction <add>, %0, %cst [1] : vector<1x128xf32> to vector<1xf32>
    %2 = vector.shape_cast %1 : vector<1xf32> to vector<1x1xf32>
    %c0_1 = arith.constant 0 : index
    %c0_2 = arith.constant 0 : index
    %3 = vector.load %arg1[%c0_1, %c0_2] : memref<1x1xf32, #tpu.memory_space<vmem>>, vector<1x1xf32>
    tpu.vector_store %arg1[%c0_1, %c0_2], %2 {strides = array<i32>} : memref<1x1xf32, #tpu.memory_space<vmem>>, vector<1x1xf32>,
    return
  }
}

</mosaic_0001>

<llo_original>
// kernel: tpu_custom_call.1
$region0: #{tpu_custom_call.1}
  #allocation0 [shape = 'u32[]', space=smem, size = 0x4, offset = 0x4, fixed_abs, tag = 'smem constant byte address 0x4 - core index']
  #allocation1 [shape = 'u32[72,128]{1,0:T(1,128)}', space=vmem, size = 0x9000, scoped, tag = 'internal scratch']
  %s0 = inlined_call_operand.hbm [shape: f32[1,128], index: 0, kind: input, shape index: {}]
  %s1 = inlined_call_operand.hbm [shape: f32[1,1], index: 1, kind: output, shape index: {}]
  %s2 = sld [smem:[#allocation0]]
  $region18: #{tpu_custom_call.1} parent=0
    _
  %s4 = ssub.s32 1, %s2
  %s5 = scalar_select 0, %s4, %s2
  $region1: #{tpu_custom_call.1} parent=0
    #allocation2 [shape = 'u8[512]{0}', space=vmem, size = 0x400, scoped, tag = 'input window, operand 0, single buffered']
    #allocation3 [shape = 's32[1]{0}', space=sflag, size = 0x4, scoped, tag = 'scoped memory for tpu_custom_call.1']
    #allocation4 [shape = 's32[1]{0}', space=sflag, size = 0x4, scoped, tag = 'scoped memory for tpu_custom_call.1']
    #allocation5 [shape = 'u8[512]{0}', space=vmem, size = 0x400, scoped, tag = 'output window, operand 0, single buffered']
    %6 = vsyncpa [#allocation3], 0
    %7 = vsyncpa [#allocation4], 0
    // Predicated region
    $region2: #{tpu_custom_call.1} parent=1 // pred_check
      _
    $region3: #{tpu_custom_call.1} parent=1 // pred_check_branch
      %9 = sbr.rel (0) target = $region5
    $region4: #{tpu_custom_call.1} parent=1 // pred_region
      %11 = vsyncadd [#allocation3], 0
      %s13 = sshll.u32 %s0, 4
      %s14 = int_to_ptr.hbm [resolvable:$true] %s13
      %s15 = sshll.u32 [#allocation2], 4
      %s16 = int_to_ptr.vmem [resolvable:$true] %s15
      %18 = dma.hbm_to_vmem [thread:$0]  %s14, 16, %s16, [#allocation3]
    $region5: #{tpu_custom_call.1} parent=1 // pred_fallthru
      _
    // Predicated region
    $region6: #{tpu_custom_call.1} parent=1 // pred_check
      _
    $region7: #{tpu_custom_call.1} parent=1 // pred_check_branch
      %20 = sbr.rel (0) target = $region9
    $region8: #{tpu_custom_call.1} parent=1 // pred_region
      %22 = dma.done [#allocation3], 16
    $region9: #{tpu_custom_call.1} parent=1 // pred_fallthru
      _
    %v23 = vld [vmem:[#allocation2] sm:$0x1]
    %vm24 = vcmask 1040384
    %v25 = vsel %vm24, %v23, 0.0
    %26 = vadd.xlane.f32.xlu0 %v25
    %v27 = vpop.xlane.xlu0 %26
    %vm28 = vcmask 0
    %29 = vst.msk [vmem:[#allocation5] sm:$0x1] %vm28, %v27
    // Predicated region
    $region10: #{tpu_custom_call.1} parent=1 // pred_check
      _
    $region11: #{tpu_custom_call.1} parent=1 // pred_check_branch
      %31 = sbr.rel (0) target = $region13
    $region12: #{tpu_custom_call.1} parent=1 // pred_region
      %33 = vsyncadd [#allocation4], 0
      %s35 = sshll.u32 [#allocation5], 4
      %s36 = int_to_ptr.vmem [resolvable:$true] %s35
      %s37 = sshll.u32 %s1, 4
      %s38 = int_to_ptr.hbm [resolvable:$true] %s37
      %40 = dma.vmem_to_hbm [thread:$0]  %s36, 16, %s38, [#allocation4]
    $region13: #{tpu_custom_call.1} parent=1 // pred_fallthru
      _
    // Predicated region
    $region14: #{tpu_custom_call.1} parent=1 // pred_check
      _
    $region15: #{tpu_custom_call.1} parent=1 // pred_check_branch
      %42 = sbr.rel (0) target = $region17
    $region16: #{tpu_custom_call.1} parent=1 // pred_region
      %44 = dma.done [#allocation4], 16
    $region17: #{tpu_custom_call.1} parent=1 // pred_fallthru
      _
    %45 = vsyncpa [#allocation3], 1
    %46 = vsyncpa [#allocation4], 1

</llo_original>
